<compile_context>
chip_gen: v6e
topology: v6e:2x2x1
jax: 0.10.0
libtpu: 0.0.40
codegen_flags: <defaults>
</compile_context>

<pallas_src>
import functools

import jax
import jax.numpy as jnp
from jax.experimental import pallas as pl
from jax.experimental.pallas import tpu as pltpu

LANE = 128
SUBLANE = 8


def _round_up(x, m):
    return (x + m - 1) // m * m


def mlp_kernel(x_ref, w_in_ref, b_in_ref, w_mid_ref, b_mid_ref,
               w_out_ref, b_out_ref, o_ref, *, num_mid):
    # x_ref:     (TB, 1)  f32      (batch tile)
    # w_in_ref:  (1, Hp)  f32      b_in_ref:  (1, Hp) f32
    # w_mid_ref: (Lm, Hp, Hp) bf16 b_mid_ref: (Lm, 1, Hp) f32
    # w_out_ref: (1, Hp)  f32      b_out_ref: (1, 1) f32
    # o_ref:     (TB, 1)  f32
    x = x_ref[...]                                              # (TB, 1)

    # Linear(1, H) + ReLU: contraction length is 1, so a VPU broadcast
    # multiply beats an MXU matmul here.
    h = jnp.maximum(x * w_in_ref[...] + b_in_ref[...], 0.0)    # (TB, Hp) f32

    def body(l, h):
        # bf16 MXU inputs, f32 accumulation; bias add + ReLU stay f32 on VPU.
        z = jnp.dot(h.astype(jnp.bfloat16), w_mid_ref[l],
                    preferred_element_type=jnp.float32)        # (TB, Hp) f32
        return jnp.maximum(z + b_mid_ref[l], 0.0)

    if num_mid > 0:
        h = jax.lax.fori_loop(0, num_mid, body, h, unroll=num_mid <= 8)

    # Linear(H, 1): a width-1 MXU matmul would use one output column and hit
    # the masked narrow-store path; a lane reduction is effectively free.
    y = jnp.sum(h * w_out_ref[...], axis=-1, keepdims=True)    # (TB, 1)
    o_ref[...] = y + b_out_ref[...]


def make_params(key, num_hidden_layers, hidden_dim):
    """PyTorch-layout parameters: Linear(in,out).weight has shape (out, in)."""
    assert num_hidden_layers >= 1
    # TODO(synk): num_hidden_layers == 0 (bare nn.Linear(1,1), no ReLU) is a
    # scalar affine y = x*w + b and is not routed through the Pallas kernel.
    H = hidden_dim
    n_mid = num_hidden_layers - 1
    keys = jax.random.split(key, 4 + 2 * n_mid)
    s = 0.1
    w_in = s * jax.random.normal(keys[0], (H, 1), jnp.float32)
    b_in = s * jax.random.normal(keys[1], (H,), jnp.float32)
    mids = []
    for l in range(n_mid):
        w = s * jax.random.normal(keys[2 + 2 * l], (H, H), jnp.float32)
        b = s * jax.random.normal(keys[3 + 2 * l], (H,), jnp.float32)
        mids.append((w, b))
    w_out = s * jax.random.normal(keys[2 + 2 * n_mid], (1, H), jnp.float32)
    b_out = s * jax.random.normal(keys[3 + 2 * n_mid], (1,), jnp.float32)
    return (w_in, b_in, mids, w_out, b_out)


def pack_params(params, hidden_dim):
    """Pad hidden dim to a lane multiple, pre-transpose, stack hidden layers."""
    w_in, b_in, mids, w_out, b_out = params
    H = hidden_dim
    Hp = max(_round_up(H, LANE), LANE)
    n_mid = max(len(mids), 1)   # keep a dummy layer-0 slot when depth-1

    w_in_p = jnp.zeros((1, Hp), jnp.float32).at[:, :H].set(w_in.T)
    b_in_p = jnp.zeros((1, Hp), jnp.float32).at[0, :H].set(b_in)

    w_mid_p = jnp.zeros((n_mid, Hp, Hp), jnp.float32)
    b_mid_p = jnp.zeros((n_mid, 1, Hp), jnp.float32)
    for l, (w, b) in enumerate(mids):
        w_mid_p = w_mid_p.at[l, :H, :H].set(w.T)
        b_mid_p = b_mid_p.at[l, 0, :H].set(b)
    w_mid_p = w_mid_p.astype(jnp.bfloat16)   # bf16 MXU inputs, halved VMEM/HBM

    w_out_p = jnp.zeros((1, Hp), jnp.float32).at[:, :H].set(w_out)
    b_out_p = b_out.reshape(1, 1).astype(jnp.float32)
    return (w_in_p, b_in_p, w_mid_p, b_mid_p, w_out_p, b_out_p)


def mlp_forward(x, packed, num_hidden_layers, *, batch_tile=512):
    w_in_p, b_in_p, w_mid_p, b_mid_p, w_out_p, b_out_p = packed
    B = x.shape[0]
    Hp = w_in_p.shape[1]
    n_mid = w_mid_p.shape[0]
    num_mid = num_hidden_layers - 1

    # Pad the batch so the tile evenly divides it (sublane-aligned).
    Bp = _round_up(B, SUBLANE)
    if Bp <= batch_tile:
        TB = Bp
    else:
        TB = batch_tile
        Bp = _round_up(B, TB)
    x_p = jnp.zeros((Bp, 1), jnp.float32).at[:B, :].set(x.astype(jnp.float32))

    grid = (pl.cdiv(Bp, TB),)
    flops = 2 * Bp * Hp * (Hp * num_mid + 2)
    bytes_accessed = (
        (x_p.size + Bp) * 4 + w_mid_p.size * 2
        + (b_mid_p.size + w_in_p.size + b_in_p.size + w_out_p.size + 1) * 4)

    kernel = functools.partial(mlp_kernel, num_mid=num_mid)
    out = pl.pallas_call(
        kernel,
        out_shape=jax.ShapeDtypeStruct((Bp, 1), jnp.float32),
        grid_spec=pltpu.PrefetchScalarGridSpec(
            num_scalar_prefetch=0,
            grid=grid,
            in_specs=[
                pl.BlockSpec((TB, 1), lambda i: (i, 0)),            # x streams
                pl.BlockSpec((1, Hp), lambda i: (0, 0)),            # weights
                pl.BlockSpec((1, Hp), lambda i: (0, 0)),            # stay
                pl.BlockSpec((n_mid, Hp, Hp), lambda i: (0, 0, 0)),  # resident
                pl.BlockSpec((n_mid, 1, Hp), lambda i: (0, 0, 0)),
                pl.BlockSpec((1, Hp), lambda i: (0, 0)),
                pl.BlockSpec((1, 1), lambda i: (0, 0)),
            ],
            out_specs=pl.BlockSpec((TB, 1), lambda i: (i, 0)),
        ),
        compiler_params=pltpu.CompilerParams(
            dimension_semantics=("parallel",),        # megacore-shard batch tiles
            vmem_limit_bytes=64 * 1024 * 1024,
        ),
        cost_estimate=pl.CostEstimate(
            flops=flops, transcendentals=0, bytes_accessed=bytes_accessed),
    )(x_p, w_in_p, b_in_p, w_mid_p, b_mid_p, w_out_p, b_out_p)
    return out[:B]


def mlp_reference(x, params):
    """Pure-JAX f32 reference matching the PyTorch module exactly."""
    w_in, b_in, mids, w_out, b_out = params
    h = jnp.maximum(x @ w_in.T + b_in, 0.0)
    for w, b in mids:
        h = jnp.maximum(h @ w.T + b, 0.0)
    return h @ w_out.T + b_out


if __name__ == "__main__":
    key = jax.random.PRNGKey(0)
    k_x, k_p = jax.random.split(key)

    batch = 8
    hidden_dim = 32
    num_hidden_layers = 3

    x = jax.random.normal(k_x, (batch, 1), jnp.float32)
    params = make_params(k_p, num_hidden_layers, hidden_dim)
    packed = pack_params(params, hidden_dim)

    y = mlp_forward(x, packed, num_hidden_layers)
    y = jax.block_until_ready(y)

    y_ref = mlp_reference(x, params)
    assert y.shape == (batch, 1)
    # bf16 MXU inputs -> loosened tolerance (f32 residual/elementwise path).
    max_err = float(jnp.max(jnp.abs(y - y_ref)))
    assert jnp.allclose(y, y_ref, atol=1e-2, rtol=1e-2), f"max_abs_err={max_err}"

    print("KERNEL_OK")
</pallas_src>

<mosaic_0001>
module attributes {stable_mosaic.version = 11 : i64} {
  func.func @mlp_kernel(%arg0: i32, %arg1: memref<8x1xf32, #tpu.memory_space<vmem>>, %arg2: memref<1x128xf32, #tpu.memory_space<vmem>>, %arg3: memref<1x128xf32, #tpu.memory_space<vmem>>, %arg4: memref<2x128x128xbf16, #tpu.memory_space<vmem>>, %arg5: memref<2x1x128xf32, #tpu.memory_space<vmem>>, %arg6: memref<1x128xf32, #tpu.memory_space<vmem>>, %arg7: memref<1x1xf32, #tpu.memory_space<vmem>>, %arg8: memref<8x1xf32, #tpu.memory_space<vmem>>) attributes {dimension_semantics = [#tpu.dimension_semantics<parallel>], iteration_bounds = array<i64: 1>, scalar_prefetch = 0 : i64, scratch_operands = 0 : i64, tpu.core_type = #tpu.core_type<tc>, window_params = [{transform_indices = @transform_0, window_bounds = array<i64: 8, 1>}, {pipeline_mode = #tpu.pipeline_mode<synchronous>, transform_indices = @transform_1, window_bounds = array<i64: 1, 128>}, {pipeline_mode = #tpu.pipeline_mode<synchronous>, transform_indices = @transform_2, window_bounds = array<i64: 1, 128>}, {pipeline_mode = #tpu.pipeline_mode<synchronous>, transform_indices = @transform_3, window_bounds = array<i64: 2, 128, 128>}, {pipeline_mode = #tpu.pipeline_mode<synchronous>, transform_indices = @transform_4, window_bounds = array<i64: 2, 1, 128>}, {pipeline_mode = #tpu.pipeline_mode<synchronous>, transform_indices = @transform_5, window_bounds = array<i64: 1, 128>}, {pipeline_mode = #tpu.pipeline_mode<synchronous>, transform_indices = @transform_6, window_bounds = array<i64: 1, 1>}, {transform_indices = @transform_7, window_bounds = array<i64: 8, 1>}]} {
    %c0 = arith.constant 0 : index
    %c0_0 = arith.constant 0 : index
    %0 = vector.load %arg1[%c0, %c0_0] : memref<8x1xf32, #tpu.memory_space<vmem>>, vector<8x1xf32>
    %c0_1 = arith.constant 0 : index
    %c0_2 = arith.constant 0 : index
    %1 = vector.load %arg2[%c0_1, %c0_2] : memref<1x128xf32, #tpu.memory_space<vmem>>, vector<1x128xf32>
    %2 = vector.broadcast %0 : vector<8x1xf32> to vector<8x128xf32>
    %3 = vector.broadcast %1 : vector<1x128xf32> to vector<8x128xf32>
    %4 = arith.mulf %2, %3 : vector<8x128xf32>
    %c0_3 = arith.constant 0 : index
    %c0_4 = arith.constant 0 : index
    %5 = vector.load %arg3[%c0_3, %c0_4] : memref<1x128xf32, #tpu.memory_space<vmem>>, vector<1x128xf32>
    %6 = vector.broadcast %5 : vector<1x128xf32> to vector<8x128xf32>
    %7 = arith.addf %4, %6 : vector<8x128xf32>
    %cst = arith.constant 0.000000e+00 : f32
    %8 = vector.broadcast %cst : f32 to vector<8x128xf32>
    %9 = arith.maximumf %7, %8 : vector<8x128xf32>
    %c0_i32 = arith.constant 0 : i32
    %10 = arith.truncf %9 : vector<8x128xf32> to vector<8x128xbf16>
    %11 = arith.index_cast %c0_i32 : i32 to index
    %c0_5 = arith.constant 0 : index
    %c0_6 = arith.constant 0 : index
    %12 = vector.load %arg4[%11, %c0_5, %c0_6] : memref<2x128x128xbf16, #tpu.memory_space<vmem>>, vector<1x128x128xbf16>
    %13 = vector.shape_cast %12 : vector<1x128x128xbf16> to vector<128x128xbf16>
    %cst_7 = arith.constant dense<0.000000e+00> : vector<8x128xf32>
    %14 = tpu.matmul %10, %13, %cst_7 {dimension_numbers = #tpu.dot_dimension_numbers<[1], [0], [0], [1], [0, 0, 1, 1], [], []>} : vector<8x128xbf16>, vector<128x128xbf16>, vector<8x128xf32> -> vector<8x128xf32>
    %15 = arith.index_cast %c0_i32 : i32 to index
    %c0_8 = arith.constant 0 : index
    %c0_9 = arith.constant 0 : index
    %16 = vector.load %arg5[%15, %c0_8, %c0_9] : memref<2x1x128xf32, #tpu.memory_space<vmem>>, vector<1x1x128xf32>
    %17 = vector.shape_cast %16 : vector<1x1x128xf32> to vector<1x128xf32>
    %18 = vector.broadcast %17 : vector<1x128xf32> to vector<8x128xf32>
    %19 = arith.addf %14, %18 : vector<8x128xf32>
    %cst_10 = arith.constant 0.000000e+00 : f32
    %20 = vector.broadcast %cst_10 : f32 to vector<8x128xf32>
    %21 = arith.maximumf %19, %20 : vector<8x128xf32>
    %c1_i32 = arith.constant 1 : i32
    %22 = arith.truncf %21 : vector<8x128xf32> to vector<8x128xbf16>
    %23 = arith.index_cast %c1_i32 : i32 to index
    %c0_11 = arith.constant 0 : index
    %c0_12 = arith.constant 0 : index
    %24 = vector.load %arg4[%23, %c0_11, %c0_12] : memref<2x128x128xbf16, #tpu.memory_space<vmem>>, vector<1x128x128xbf16>
    %25 = vector.shape_cast %24 : vector<1x128x128xbf16> to vector<128x128xbf16>
    %cst_13 = arith.constant dense<0.000000e+00> : vector<8x128xf32>
    %26 = tpu.matmul %22, %25, %cst_13 {dimension_numbers = #tpu.dot_dimension_numbers<[1], [0], [0], [1], [0, 0, 1, 1], [], []>} : vector<8x128xbf16>, vector<128x128xbf16>, vector<8x128xf32> -> vector<8x128xf32>
    %27 = arith.index_cast %c1_i32 : i32 to index
    %c0_14 = arith.constant 0 : index
    %c0_15 = arith.constant 0 : index
    %28 = vector.load %arg5[%27, %c0_14, %c0_15] : memref<2x1x128xf32, #tpu.memory_space<vmem>>, vector<1x1x128xf32>
    %29 = vector.shape_cast %28 : vector<1x1x128xf32> to vector<1x128xf32>
    %30 = vector.broadcast %29 : vector<1x128xf32> to vector<8x128xf32>
    %31 = arith.addf %26, %30 : vector<8x128xf32>
    %cst_16 = arith.constant 0.000000e+00 : f32
    %32 = vector.broadcast %cst_16 : f32 to vector<8x128xf32>
    %33 = arith.maximumf %31, %32 : vector<8x128xf32>
    %c2_i32 = arith.constant 2 : i32
    %c0_17 = arith.constant 0 : index
    %c0_18 = arith.constant 0 : index
    %34 = vector.load %arg6[%c0_17, %c0_18] : memref<1x128xf32, #tpu.memory_space<vmem>>, vector<1x128xf32>
    %35 = vector.broadcast %34 : vector<1x128xf32> to vector<8x128xf32>
    %36 = arith.mulf %33, %35 : vector<8x128xf32>
    %cst_19 = arith.constant dense<0.000000e+00> : vector<8xf32>
    %37 = vector.multi_reduction <add>, %36, %cst_19 [1] : vector<8x128xf32> to vector<8xf32>
    %38 = vector.shape_cast %37 : vector<8xf32> to vector<8x1xf32>
    %c0_20 = arith.constant 0 : index
    %c0_21 = arith.constant 0 : index
    %39 = vector.load %arg7[%c0_20, %c0_21] : memref<1x1xf32, #tpu.memory_space<vmem>>, vector<1x1xf32>
    %40 = vector.broadcast %39 : vector<1x1xf32> to vector<8x1xf32>
    %41 = arith.addf %38, %40 : vector<8x1xf32>
    %c0_22 = arith.constant 0 : index
    %c0_23 = arith.constant 0 : index
    %42 = vector.load %arg8[%c0_22, %c0_23] : memref<8x1xf32, #tpu.memory_space<vmem>>, vector<8x1xf32>
    tpu.vector_store %arg8[%c0_22, %c0_23], %41 {strides = array<i32>} : memref<8x1xf32, #tpu.memory_space<vmem>>, vector<8x1xf32>,
    return
  }
  func.func @transform_0(%arg0: i32) -> (i32, i32) {
    %c0_i32 = arith.constant 0 : i32
    %c0_i32_0 = arith.constant 0 : i32
    return %arg0, %c0_i32 : i32, i32
  }
  func.func @transform_1(%arg0: i32) -> (i32, i32) {
    %c0_i32 = arith.constant 0 : i32
    %c0_i32_0 = arith.constant 0 : i32
    %c0_i32_1 = arith.constant 0 : i32
    return %c0_i32, %c0_i32_0 : i32, i32
  }
  func.func @transform_2(%arg0: i32) -> (i32, i32) {
    %c0_i32 = arith.constant 0 : i32
    %c0_i32_0 = arith.constant 0 : i32
    %c0_i32_1 = arith.constant 0 : i32
    return %c0_i32, %c0_i32_0 : i32, i32
  }
  func.func @transform_3(%arg0: i32) -> (i32, i32, i32) {
    %c0_i32 = arith.constant 0 : i32
    %c0_i32_0 = arith.constant 0 : i32
    %c0_i32_1 = arith.constant 0 : i32
    %c0_i32_2 = arith.constant 0 : i32
    return %c0_i32, %c0_i32_0, %c0_i32_1 : i32, i32, i32
  }
  func.func @transform_4(%arg0: i32) -> (i32, i32, i32) {
    %c0_i32 = arith.constant 0 : i32
    %c0_i32_0 = arith.constant 0 : i32
    %c0_i32_1 = arith.constant 0 : i32
    %c0_i32_2 = arith.constant 0 : i32
    return %c0_i32, %c0_i32_0, %c0_i32_1 : i32, i32, i32
  }
  func.func @transform_5(%arg0: i32) -> (i32, i32) {
    %c0_i32 = arith.constant 0 : i32
    %c0_i32_0 = arith.constant 0 : i32
    %c0_i32_1 = arith.constant 0 : i32
    return %c0_i32, %c0_i32_0 : i32, i32
  }
  func.func @transform_6(%arg0: i32) -> (i32, i32) {
    %c0_i32 = arith.constant 0 : i32
    %c0_i32_0 = arith.constant 0 : i32
    %c0_i32_1 = arith.constant 0 : i32
    return %c0_i32, %c0_i32_0 : i32, i32
  }
  func.func @transform_7(%arg0: i32) -> (i32, i32) {
    %c0_i32 = arith.constant 0 : i32
    %c0_i32_0 = arith.constant 0 : i32
    return %arg0, %c0_i32 : i32, i32
  }
}

</mosaic_0001>

<llo_original>
// kernel: tpu_custom_call.1
$region0: #{tpu_custom_call.1}
  #allocation0 [shape = 'u32[]', space=smem, size = 0x4, offset = 0x4, fixed_abs, tag = 'smem constant byte address 0x4 - core index']
  #allocation1 [shape = 'u32[144,128]{1,0:T(1,128)}', space=vmem, size = 0x12000, scoped, tag = 'internal scratch']
  #allocation2 [shape = 'f32[1,1]{1,0:T(1,128)S(1)}', space=vmem, size = 0x200, scoped, tag = 'scoped memory for tpu_custom_call.1']
  %s0 = inlined_call_operand.vmem [shape: f32[8,1], index: 0, kind: input, shape index: {}]
  %s1 = inlined_call_operand.vmem [shape: f32[1,128], index: 1, kind: input, shape index: {}]
  %s2 = inlined_call_operand.vmem [shape: f32[1,128], index: 2, kind: input, shape index: {}]
  %s3 = inlined_call_operand.hbm [shape: bf16[2,128,128], index: 3, kind: input, shape index: {}]
  %s4 = inlined_call_operand.vmem [shape: f32[2,1,128], index: 4, kind: input, shape index: {}]
  %s5 = inlined_call_operand.vmem [shape: f32[1,128], index: 5, kind: input, shape index: {}]
  %s6 = inlined_call_operand.<no memory space> [shape: f32[1,1], index: 6, kind: input, shape index: {}]
  %s7 = inlined_call_operand.vmem [shape: f32[8,1], index: 7, kind: output, shape index: {}]
  %s8 = sld [smem:[#allocation0]]
  $region42: #{tpu_custom_call.1} parent=0
    _
  %s10 = ssub.s32 1, %s8
  %s11 = scalar_select 0, %s10, %s8
  %v12 = vstv %s6
  %13 = vst [vmem:[#allocation2] sm:$0x1] %v12
  $region1: #{tpu_custom_call.1} parent=0
    #allocation3 [shape = 'u8[65536]{0}', space=vmem, size = 0x10000, scoped, tag = 'input window, operand 3, single buffered']
    #allocation4 [shape = 's32[1]{0}', space=sflag, size = 0x4, scoped, tag = 'scoped memory for tpu_custom_call.1']
    %14 = vsyncpa [#allocation4], 0
    // Predicated region
    $region2: #{tpu_custom_call.1} parent=1 // pred_check
      _
    $region3: #{tpu_custom_call.1} parent=1 // pred_check_branch
      %16 = sbr.rel (0) target = $region5
    $region4: #{tpu_custom_call.1} parent=1 // pred_region
      _
    $region5: #{tpu_custom_call.1} parent=1 // pred_fallthru
      _
    // Predicated region
    $region6: #{tpu_custom_call.1} parent=1 // pred_check
      _
    $region7: #{tpu_custom_call.1} parent=1 // pred_check_branch
      %18 = sbr.rel (0) target = $region9
    $region8: #{tpu_custom_call.1} parent=1 // pred_region
      _
    $region9: #{tpu_custom_call.1} parent=1 // pred_fallthru
      _
    // Predicated region
    $region10: #{tpu_custom_call.1} parent=1 // pred_check
      _
    $region11: #{tpu_custom_call.1} parent=1 // pred_check_branch
      %20 = sbr.rel (0) target = $region13
    $region12: #{tpu_custom_call.1} parent=1 // pred_region
      _
    $region13: #{tpu_custom_call.1} parent=1 // pred_fallthru
      _
    // Predicated region
    $region14: #{tpu_custom_call.1} parent=1 // pred_check
      _
    $region15: #{tpu_custom_call.1} parent=1 // pred_check_branch
      %22 = sbr.rel (0) target = $region17
    $region16: #{tpu_custom_call.1} parent=1 // pred_region
      %s24 = ssub.s32 2048, 2048
      %25 = vsyncadd [#allocation4], %s24
      %s26 = sshll.u32 [#allocation3], 4
      %s27 = int_to_ptr.vmem [resolvable:$true] %s26
      %32 = dma.hbm_to_vmem [thread:$0]  %s3, 2048, %s27, [#allocation4], 64, 64, 4
    $region17: #{tpu_custom_call.1} parent=1 // pred_fallthru
      _
    // Predicated region
    $region18: #{tpu_custom_call.1} parent=1 // pred_check
      _
    $region19: #{tpu_custom_call.1} parent=1 // pred_check_branch
      %34 = sbr.rel (0) target = $region21
    $region20: #{tpu_custom_call.1} parent=1 // pred_region
      _
    $region21: #{tpu_custom_call.1} parent=1 // pred_fallthru
      _
    // Predicated region
    $region22: #{tpu_custom_call.1} parent=1 // pred_check
      _
    $region23: #{tpu_custom_call.1} parent=1 // pred_check_branch
      %36 = sbr.rel (0) target = $region25
    $region24: #{tpu_custom_call.1} parent=1 // pred_region
      _
    $region25: #{tpu_custom_call.1} parent=1 // pred_fallthru
      _
    // Predicated region
    $region26: #{tpu_custom_call.1} parent=1 // pred_check
      _
    $region27: #{tpu_custom_call.1} parent=1 // pred_check_branch
      %38 = sbr.rel (0) target = $region29
    $region28: #{tpu_custom_call.1} parent=1 // pred_region
      _
    $region29: #{tpu_custom_call.1} parent=1 // pred_fallthru
      _
    // Predicated region
    $region30: #{tpu_custom_call.1} parent=1 // pred_check
      _
    $region31: #{tpu_custom_call.1} parent=1 // pred_check_branch
      %40 = sbr.rel (0) target = $region33
    $region32: #{tpu_custom_call.1} parent=1 // pred_region
      %41 = dma.done [#allocation4], 2048
    $region33: #{tpu_custom_call.1} parent=1 // pred_fallthru
      _
    %v43 = vld [vmem:[%s0] sm:$0xff]
    %v44 = vld [vmem:[%s1] sm:$0x1]
    %46 = vset.pattern.permute.xlu0 0
    %47 = vperm.xlu0 %46, %v43
    %v48 = vpop.permute.xlu0 %47
    %v51 = vlaneseq
    %v52 = vshrl.u32 %v51, 7
    %v53 = vsub.s32 0, %v52
    %v54 = vrot.slane %v44, %v53
    %v56 = vmul.f32 %v48, %v54
    %v57 = vld [vmem:[%s2] sm:$0x1]
    %v59 = vlaneseq
    %v60 = vshrl.u32 %v59, 7
    %v61 = vsub.s32 0, %v60
    %v62 = vrot.slane %v57, %v61
    %v64 = vadd.f32 %v56, %v62
    %v65 = vmax.f32 %v64, 0.0
    %v66 = vpack.c.bf16 %v65, %v65
    %v67 = vld [vmem:[#allocation3] sm:$0xf]
    %v68 = vld [vmem:[#allocation3 + $0x4] sm:$0xf]
    %v69 = vld [vmem:[#allocation3 + $0x8] sm:$0xf]
    %v70 = vld [vmem:[#allocation3 + $0xc] sm:$0xf]
    %v71 = vld [vmem:[#allocation3 + $0x10] sm:$0xf]
    %v72 = vld [vmem:[#allocation3 + $0x14] sm:$0xf]
    %v73 = vld [vmem:[#allocation3 + $0x18] sm:$0xf]
    %v74 = vld [vmem:[#allocation3 + $0x1c] sm:$0xf]
    %v75 = vld [vmem:[#allocation3 + $0x20] sm:$0xf]
    %v76 = vld [vmem:[#allocation3 + $0x24] sm:$0xf]
    %v77 = vld [vmem:[#allocation3 + $0x28] sm:$0xf]
    %v78 = vld [vmem:[#allocation3 + $0x2c] sm:$0xf]
    %v79 = vld [vmem:[#allocation3 + $0x30] sm:$0xf]
    %v80 = vld [vmem:[#allocation3 + $0x34] sm:$0xf]
    %v81 = vld [vmem:[#allocation3 + $0x38] sm:$0xf]
    %v82 = vld [vmem:[#allocation3 + $0x3c] sm:$0xf]
    %v83 = vld [vmem:[%s4] sm:$0x1]
    %v85 = vlaneseq
    %v86 = vshrl.u32 %v85, 7
    %v87 = vsub.s32 0, %v86
    %v88 = vrot.slane %v83, %v87
    %v106 = vunpack.c.l.b16 %v67
    %v107 = vunpack.c.l.b16 %v68
    %v108 = vunpack.c.l.b16 %v69
    %v109 = vunpack.c.l.b16 %v70
    %v110 = vunpack.c.l.b16 %v71
    %v111 = vunpack.c.l.b16 %v72
    %v112 = vunpack.c.l.b16 %v73
    %v113 = vunpack.c.l.b16 %v74
    %v114 = vunpack.c.l.b16 %v75
    %v115 = vunpack.c.l.b16 %v76
    %v116 = vunpack.c.l.b16 %v77
    %v117 = vunpack.c.l.b16 %v78
    %v118 = vunpack.c.l.b16 %v79
    %v119 = vunpack.c.l.b16 %v80
    %v120 = vunpack.c.l.b16 %v81
    %v121 = vunpack.c.l.b16 %v82
    %v122 = vpack.c.b16 %v107, %v106
    %v123 = vpack.c.b16 %v109, %v108
    %v124 = vpack.c.b16 %v111, %v110
    %v125 = vpack.c.b16 %v113, %v112
    %v126 = vpack.c.b16 %v115, %v114
    %v127 = vpack.c.b16 %v117, %v116
    %v128 = vpack.c.b16 %v119, %v118
    %v129 = vpack.c.b16 %v121, %v120
    %138 = vmatprep.subr.bf16.mxu0 0
    %139 = vmatpush1.bf16.msra.mxu0 %v129
    %140 = vmatprep.subr.bf16.mxu0 0
    %141 = vmatpush1.bf16.msra.mxu0 %v128
    %142 = vmatprep.subr.bf16.mxu0 0
    %143 = vmatpush1.bf16.msra.mxu0 %v127
    %144 = vmatprep.subr.bf16.mxu0 0
    %145 = vmatpush1.bf16.msra.mxu0 %v126
    %146 = vmatprep.subr.bf16.mxu0 0
    %147 = vmatpush1.bf16.msra.mxu0 %v125
    %148 = vmatprep.subr.bf16.mxu0 0
    %149 = vmatpush1.bf16.msra.mxu0 %v124
    %150 = vmatprep.subr.bf16.mxu0 0
    %151 = vmatpush1.bf16.msra.mxu0 %v123
    %152 = vmatprep.subr.bf16.mxu0 0
    %153 = vmatpush1.bf16.msra.mxu0 %v122
    %154 = vmatprep.subr.bf16.mxu0 0
    %155 = vmatpush2.bf16.msra.mxu0 0
    %156 = vmatprep.subr.bf16.mxu0 0
    %157 = vmatpush2.bf16.msra.mxu0 0
    %158 = vmatprep.subr.bf16.mxu0 0
    %159 = vmatpush2.bf16.msra.mxu0 0
    %160 = vmatprep.subr.bf16.mxu0 0
    %161 = vmatpush2.bf16.msra.mxu0 0
    %162 = vmatprep.subr.bf16.mxu0 0
    %163 = vmatpush2.bf16.msra.mxu0 0
    %164 = vmatprep.subr.bf16.mxu0 0
    %165 = vmatpush2.bf16.msra.mxu0 0
    %166 = vmatprep.subr.bf16.mxu0 0
    %167 = vmatpush2.bf16.msra.mxu0 0
    %168 = vmatprep.subr.bf16.mxu0 0
    %169 = vmatpush2.bf16.msra.mxu0 0
    %170 = vmatprep.mubr.bf16.mxu0 0
    %171 = vmatmul.mubr.bf16.gmra.mxu0 %v66
    %v172 = vpop.f32.mrf.mxu0
    %v173 = vadd.f32 %v88, %v172
    %v174 = vpop.f32.mrf.mxu0
    %v175 = vpop.f32.mrf.mxu0
    %v176 = vpop.f32.mrf.mxu0
    %177 = vdwg.mxu0
    %v178 = vmax.f32 %v173, 0.0
    %v179 = vpack.c.bf16 %v178, %v178
    %s180 = scalar_lea.vmem [#allocation3], 64
    %v181 = vld [vmem:[%s180] sm:$0xf]
    %v182 = vld [vmem:[%s180 + $0x4] sm:$0xf]
    %v183 = vld [vmem:[%s180 + $0x8] sm:$0xf]
    %v184 = vld [vmem:[%s180 + $0xc] sm:$0xf]
    %v185 = vld [vmem:[%s180 + $0x10] sm:$0xf]
    %v186 = vld [vmem:[%s180 + $0x14] sm:$0xf]
    %v187 = vld [vmem:[%s180 + $0x18] sm:$0xf]
    %v188 = vld [vmem:[%s180 + $0x1c] sm:$0xf]
    %v189 = vld [vmem:[%s180 + $0x20] sm:$0xf]
    %v190 = vld [vmem:[%s180 + $0x24] sm:$0xf]
    %v191 = vld [vmem:[%s180 + $0x28] sm:$0xf]
    %v192 = vld [vmem:[%s180 + $0x2c] sm:$0xf]
    %v193 = vld [vmem:[%s180 + $0x30] sm:$0xf]
    %v194 = vld [vmem:[%s180 + $0x34] sm:$0xf]
    %v195 = vld [vmem:[%s180 + $0x38] sm:$0xf]
    %v196 = vld [vmem:[%s180 + $0x3c] sm:$0xf]
    %s197 = scalar_lea.vmem %s4, 1
    %v198 = vld [vmem:[%s197] sm:$0x1]
    %v200 = vlaneseq
    %v201 = vshrl.u32 %v200, 7
    %v202 = vsub.s32 0, %v201
    %v203 = vrot.slane %v198, %v202
    %v221 = vunpack.c.l.b16 %v181
    %v222 = vunpack.c.l.b16 %v182
    %v223 = vunpack.c.l.b16 %v183
    %v224 = vunpack.c.l.b16 %v184
    %v225 = vunpack.c.l.b16 %v185
    %v226 = vunpack.c.l.b16 %v186
    %v227 = vunpack.c.l.b16 %v187
    %v228 = vunpack.c.l.b16 %v188
    %v229 = vunpack.c.l.b16 %v189
    %v230 = vunpack.c.l.b16 %v190
    %v231 = vunpack.c.l.b16 %v191
    %v232 = vunpack.c.l.b16 %v192
    %v233 = vunpack.c.l.b16 %v193
    %v234 = vunpack.c.l.b16 %v194
    %v235 = vunpack.c.l.b16 %v195
    %v236 = vunpack.c.l.b16 %v196
    %v237 = vpack.c.b16 %v222, %v221
    %v238 = vpack.c.b16 %v224, %v223
    %v239 = vpack.c.b16 %v226, %v225
    %v240 = vpack.c.b16 %v228, %v227
    %v241 = vpack.c.b16 %v230, %v229
    %v242 = vpack.c.b16 %v232, %v231
    %v243 = vpack.c.b16 %v234, %v233
    %v244 = vpack.c.b16 %v236, %v235
    %253 = vmatprep.subr.bf16.mxu0 0
    %254 = vmatpush1.bf16.msra.mxu0 %v244
    %255 = vmatprep.subr.bf16.mxu0 0
    %256 = vmatpush1.bf16.msra.mxu0 %v243
    %257 = vmatprep.subr.bf16.mxu0 0
    %258 = vmatpush1.bf16.msra.mxu0 %v242
    %259 = vmatprep.subr.bf16.mxu0 0
    %260 = vmatpush1.bf16.msra.mxu0 %v241
    %261 = vmatprep.subr.bf16.mxu0 0
    %262 = vmatpush1.bf16.msra.mxu0 %v240
    %263 = vmatprep.subr.bf16.mxu0 0
    %264 = vmatpush1.bf16.msra.mxu0 %v239
    %265 = vmatprep.subr.bf16.mxu0 0
    %266 = vmatpush1.bf16.msra.mxu0 %v238
    %267 = vmatprep.subr.bf16.mxu0 0
    %268 = vmatpush1.bf16.msra.mxu0 %v237
    %269 = vmatprep.subr.bf16.mxu0 0
    %270 = vmatpush2.bf16.msra.mxu0 0
    %271 = vmatprep.subr.bf16.mxu0 0
    %272 = vmatpush2.bf16.msra.mxu0 0
    %273 = vmatprep.subr.bf16.mxu0 0
    %274 = vmatpush2.bf16.msra.mxu0 0
    %275 = vmatprep.subr.bf16.mxu0 0
    %276 = vmatpush2.bf16.msra.mxu0 0
    %277 = vmatprep.subr.bf16.mxu0 0
    %278 = vmatpush2.bf16.msra.mxu0 0
    %279 = vmatprep.subr.bf16.mxu0 0
    %280 = vmatpush2.bf16.msra.mxu0 0
    %281 = vmatprep.subr.bf16.mxu0 0
    %282 = vmatpush2.bf16.msra.mxu0 0
    %283 = vmatprep.subr.bf16.mxu0 0
    %284 = vmatpush2.bf16.msra.mxu0 0
    %285 = vmatprep.mubr.bf16.mxu0 0
    %286 = vmatmul.mubr.bf16.gmra.mxu0 %v179
    %v287 = vpop.f32.mrf.mxu0
    %v288 = vadd.f32 %v203, %v287
    %v289 = vpop.f32.mrf.mxu0
    %v290 = vpop.f32.mrf.mxu0
    %v291 = vpop.f32.mrf.mxu0
    %292 = vdwg.mxu0
    %v293 = vmax.f32 %v288, 0.0
    %v294 = vld [vmem:[%s5] sm:$0x1]
    %v296 = vlaneseq
    %v297 = vshrl.u32 %v296, 7
    %v298 = vsub.s32 0, %v297
    %v299 = vrot.slane %v294, %v298
    %v301 = vmul.f32 %v293, %v299
    %302 = vadd.xlane.f32.xlu0 %v301
    %v303 = vpop.xlane.xlu0 %302
    %v304 = vld [vmem:[#allocation2] sm:$0x1]
    %v306 = vlaneseq
    %v307 = vshrl.u32 %v306, 7
    %v308 = vsub.s32 0, %v307
    %v309 = vrot.slane %v304, %v308
    %v311 = vadd.f32 %v303, %v309
    %vm312 = vcmask 7168
    %313 = vst.msk [vmem:[%s7] sm:$0xff] %vm312, %v311
    // Predicated region
    $region34: #{tpu_custom_call.1} parent=1 // pred_check
      _
    $region35: #{tpu_custom_call.1} parent=1 // pred_check_branch
      %315 = sbr.rel (0) target = $region37
    $region36: #{tpu_custom_call.1} parent=1 // pred_region
      _
    $region37: #{tpu_custom_call.1} parent=1 // pred_fallthru
      _
    // Predicated region
    $region38: #{tpu_custom_call.1} parent=1 // pred_check
      _
    $region39: #{tpu_custom_call.1} parent=1 // pred_check_branch
      %317 = sbr.rel (0) target = $region41
    $region40: #{tpu_custom_call.1} parent=1 // pred_region
      _
    $region41: #{tpu_custom_call.1} parent=1 // pred_fallthru
      _
    %318 = vsyncpa [#allocation4], 1

</llo_original>
